<compile_context>
chip_gen: v7x
topology: tpu7x:2x2x1
jax: 0.10.0
libtpu: 0.0.40
codegen_flags: <defaults>
</compile_context>

<pallas_src>
import jax
import jax.numpy as jnp
from jax.experimental import pallas as pl
from jax.experimental.pallas import tpu as pltpu

H1 = 128
H2 = 256


def critic_kernel(x_ref, w1_ref, w2_ref, w3_ref, b12_ref, b3_ref, o_ref):
    """One batch tile of the fused MLP.

    x_ref   : (TB, S)    input activations, f32
    w1_ref  : (S, 128)   layer-1 weights (f32 or bf16)
    w2_ref  : (128, 256) layer-2 weights (f32 or bf16)
    w3_ref  : (1, 256)   layer-3 weights, pre-transposed to a lane-dense row
    b12_ref : (1, 384)   [b1 | b2] packed lane-dense, f32
    b3_ref  : (1, 1)     layer-3 bias, SMEM scalar, f32
    o_ref   : (1, TB)    lane-dense output (batch on the lane axis)
    """
    w_dtype = w1_ref.dtype

    # Layers 1 & 2 on the MXU with f32 accumulation; bias+ReLU on the VPU (f32).
    h1 = jnp.dot(x_ref[...].astype(w_dtype), w1_ref[...],
                 preferred_element_type=jnp.float32)
    h1 = jnp.maximum(h1 + b12_ref[:, :H1], 0.0)

    h2 = jnp.dot(h1.astype(w_dtype), w2_ref[...],
                 preferred_element_type=jnp.float32)
    h2 = jnp.maximum(h2 + b12_ref[:, H1:], 0.0)

    # Layer 3 (256 -> 1): VPU multiply + XLU lane reduction instead of an N=1 matmul.
    w3 = w3_ref[...].astype(jnp.float32)                  # (1, 256)
    v = jnp.sum(h2 * w3, axis=-1) + b3_ref[0, 0]          # (TB,)

    # Lane-dense store: batch lives on the lane axis -> unmasked vst for TB>=128.
    o_ref[...] = v[None, :].astype(o_ref.dtype)


def _select_tiling(B, block_b):
    """Return (padded_B, batch_tile) from a small fixed bucket table.

    - B <= 256        : single power-of-two bucket (min 8), grid = 1.
    - 256 < B <= blk  : power-of-two bucket split into 2 tiles -> grid = 2,
                        so both v7x TensorCores get work ("parallel" axis).
    - B > blk         : tiles of block_b (big tiles amortize the ~0.35 us
                        per-grid-step overhead).
    Buckets keep the batch (sublane) dim a multiple of 8 and bound the number
    of distinct compiled kernels.
    """
    if B <= 256:
        bp = max(8, pl.next_power_of_2(B))
        return bp, bp
    if B <= block_b:
        bp = pl.next_power_of_2(B)
        return bp, bp // 2
    bp = pl.cdiv(B, block_b) * block_b
    return bp, block_b


def critic_forward(x, params, *, block_b=2048):
    """x: (B, state_dim). Returns (B, 1) f32 — same semantics as the PyTorch module."""
    assert block_b >= 256 and block_b % 128 == 0, "block_b must be a multiple of 128, >= 256"
    w1, b1 = params["w1"], params["b1"]
    w2, b2 = params["w2"], params["b2"]
    w3, b3 = params["w3"], params["b3"]
    B, S = x.shape

    # Pack hidden-layer biases lane-dense; pre-transpose w3; b3 -> SMEM scalar.
    b12 = jnp.concatenate(
        [b1.reshape(1, H1), b2.reshape(1, H2)], axis=-1).astype(jnp.float32)
    w3_row = w3.reshape(1, H2)
    b3_s = b3.reshape(1, 1).astype(jnp.float32)

    # Bucketed batch tiling (fixed tile-size table -> no per-B recompiles).
    Bp, tb = _select_tiling(B, block_b)
    xp = x if Bp == B else jnp.pad(x, ((0, Bp - B), (0, 0)))

    const2d = lambda a: pl.BlockSpec(a.shape, lambda i: (0, 0))  # VMEM-resident

    out = pl.pallas_call(
        critic_kernel,
        out_shape=jax.ShapeDtypeStruct((1, Bp), jnp.float32),
        grid=(Bp // tb,),
        in_specs=[
            pl.BlockSpec((tb, S), lambda i: (i, 0)),            # x: batch-tiled
            const2d(w1),
            const2d(w2),
            const2d(w3_row),
            const2d(b12),
            pl.BlockSpec(memory_space=pltpu.MemorySpace.SMEM),  # b3 scalar
        ],
        out_specs=pl.BlockSpec((1, tb), lambda i: (0, i)),      # lane-dense
        compiler_params=pltpu.CompilerParams(
            dimension_semantics=("parallel",),  # shard batch tiles across cores
        ),
    )(xp, w1, w2, w3_row, b12, b3_s)

    return out.reshape(Bp, 1)[:B]


def init_params(key, state_dim, dtype=jnp.bfloat16):
    """Scaled-normal init. Weights stored (in, out) in `dtype`
    (default bfloat16: native MXU path + half the weight DMA); biases kept f32."""
    ks = jax.random.split(key, 6)

    def lin(kw, kb, fan_in, fan_out):
        scale = 1.0 / jnp.sqrt(jnp.float32(fan_in))
        w = (jax.random.normal(kw, (fan_in, fan_out), jnp.float32) * scale).astype(dtype)
        b = jax.random.normal(kb, (1, fan_out), jnp.float32) * scale
        return w, b

    w1, b1 = lin(ks[0], ks[1], state_dim, H1)
    w2, b2 = lin(ks[2], ks[3], H1, H2)
    w3, b3 = lin(ks[4], ks[5], H2, 1)
    return {"w1": w1, "b1": b1, "w2": w2, "b2": b2, "w3": w3, "b3": b3}


def critic_reference(x, p):
    f32 = jnp.float32
    h1 = jnp.maximum(x @ p["w1"].astype(f32) + p["b1"].astype(f32), 0.0)
    h2 = jnp.maximum(h1 @ p["w2"].astype(f32) + p["b2"].astype(f32), 0.0)
    return h2 @ p["w3"].astype(f32) + p["b3"].astype(f32)


if __name__ == "__main__":
    key = jax.random.PRNGKey(0)
    k_p, k_x1, k_x2, k_x3 = jax.random.split(key, 4)

    state_dim = 16
    params_f32 = init_params(k_p, state_dim, dtype=jnp.float32)

    # 1) Small batch (typical RL step): bucketed to 8 rows, single grid block.
    x1 = jax.random.normal(k_x1, (8, state_dim), jnp.float32)
    out1 = jax.block_until_ready(critic_forward(x1, params_f32))
    ref1 = critic_reference(x1, params_f32)
    assert out1.shape == (8, 1), out1.shape
    assert jnp.allclose(out1, ref1, atol=1e-4, rtol=1e-4), (out1, ref1)

    # 2) Mid-size batch: bucket 512 split into 2 tiles of 256 (grid=2 -> both
    #    v7x cores), with row padding.
    x2 = jax.random.normal(k_x2, (300, state_dim), jnp.float32)
    out2 = jax.block_until_ready(critic_forward(x2, params_f32))
    ref2 = critic_reference(x2, params_f32)
    assert out2.shape == (300, 1), out2.shape
    assert jnp.allclose(out2, ref2, atol=1e-4, rtol=1e-4)

    # 3) Large-batch branch (B > block_b): exercised with block_b=512 to keep
    #    the test small -> Bp=1536, 3 tiles of 512.
    x3 = jax.random.normal(k_x3, (1200, state_dim), jnp.float32)
    out3 = jax.block_until_ready(critic_forward(x3, params_f32, block_b=512))
    ref3 = critic_reference(x3, params_f32)
    assert out3.shape == (1200, 1), out3.shape
    assert jnp.allclose(out3, ref3, atol=1e-4, rtol=1e-4)

    # 4) Default bf16 weight storage (native MXU path, activations downcast to
    #    bf16 at the matmuls -- documented precision trade), f32 accumulation.
    params_bf16 = init_params(k_p, state_dim)  # default dtype=bfloat16
    out4 = jax.block_until_ready(critic_forward(x1, params_bf16))
    ref4 = critic_reference(x1, params_bf16)
    assert out4.shape == (8, 1), out4.shape
    assert jnp.allclose(out4, ref4, atol=5e-2, rtol=5e-2), (out4, ref4)

    print("KERNEL_OK")
</pallas_src>

<mosaic_0001>
module attributes {stable_mosaic.version = 11 : i64} {
  func.func @critic_kernel(%arg0: i32, %arg1: memref<8x16xf32, #tpu.memory_space<vmem>>, %arg2: memref<16x128xf32, #tpu.memory_space<vmem>>, %arg3: memref<128x256xf32, #tpu.memory_space<vmem>>, %arg4: memref<1x256xf32, #tpu.memory_space<vmem>>, %arg5: memref<1x384xf32, #tpu.memory_space<vmem>>, %arg6: memref<1x1xf32, #tpu.memory_space<smem>>, %arg7: memref<1x8xf32, #tpu.memory_space<vmem>>) attributes {dimension_semantics = [#tpu.dimension_semantics<parallel>], iteration_bounds = array<i64: 1>, scalar_prefetch = 0 : i64, scratch_operands = 0 : i64, tpu.core_type = #tpu.core_type<tc>, window_params = [{transform_indices = @transform_0, window_bounds = array<i64: 8, 16>}, {pipeline_mode = #tpu.pipeline_mode<synchronous>, transform_indices = @transform_1, window_bounds = array<i64: 16, 128>}, {pipeline_mode = #tpu.pipeline_mode<synchronous>, transform_indices = @transform_2, window_bounds = array<i64: 128, 256>}, {pipeline_mode = #tpu.pipeline_mode<synchronous>, transform_indices = @transform_3, window_bounds = array<i64: 1, 256>}, {pipeline_mode = #tpu.pipeline_mode<synchronous>, transform_indices = @transform_4, window_bounds = array<i64: 1, 384>}, {transform_indices = @transform_5, window_bounds = array<i64: 1, 1>}, {transform_indices = @transform_6, window_bounds = array<i64: 1, 8>}]} {
    %c0 = arith.constant 0 : index
    %c0_0 = arith.constant 0 : index
    %0 = vector.load %arg1[%c0, %c0_0] : memref<8x16xf32, #tpu.memory_space<vmem>>, vector<8x16xf32>
    %c0_1 = arith.constant 0 : index
    %c0_2 = arith.constant 0 : index
    %1 = vector.load %arg2[%c0_1, %c0_2] : memref<16x128xf32, #tpu.memory_space<vmem>>, vector<16x128xf32>
    %cst = arith.constant dense<0.000000e+00> : vector<8x128xf32>
    %2 = tpu.matmul %0, %1, %cst {dimension_numbers = #tpu.dot_dimension_numbers<[1], [0], [0], [1], [0, 0, 1, 1], [], []>} : vector<8x16xf32>, vector<16x128xf32>, vector<8x128xf32> -> vector<8x128xf32>
    %c0_3 = arith.constant 0 : index
    %c0_4 = arith.constant 0 : index
    %3 = vector.load %arg5[%c0_3, %c0_4] : memref<1x384xf32, #tpu.memory_space<vmem>>, vector<1x128xf32>
    %4 = vector.broadcast %3 : vector<1x128xf32> to vector<8x128xf32>
    %5 = arith.addf %2, %4 : vector<8x128xf32>
    %cst_5 = arith.constant 0.000000e+00 : f32
    %6 = vector.broadcast %cst_5 : f32 to vector<8x128xf32>
    %7 = arith.maximumf %5, %6 : vector<8x128xf32>
    %c0_6 = arith.constant 0 : index
    %c0_7 = arith.constant 0 : index
    %8 = vector.load %arg3[%c0_6, %c0_7] : memref<128x256xf32, #tpu.memory_space<vmem>>, vector<128x256xf32>
    %cst_8 = arith.constant dense<0.000000e+00> : vector<8x256xf32>
    %9 = tpu.matmul %7, %8, %cst_8 {dimension_numbers = #tpu.dot_dimension_numbers<[1], [0], [0], [1], [0, 0, 1, 1], [], []>} : vector<8x128xf32>, vector<128x256xf32>, vector<8x256xf32> -> vector<8x256xf32>
    %c0_9 = arith.constant 0 : index
    %c128 = arith.constant 128 : index
    %10 = vector.load %arg5[%c0_9, %c128] : memref<1x384xf32, #tpu.memory_space<vmem>>, vector<1x256xf32>
    %11 = vector.broadcast %10 : vector<1x256xf32> to vector<8x256xf32>
    %12 = arith.addf %9, %11 : vector<8x256xf32>
    %cst_10 = arith.constant 0.000000e+00 : f32
    %13 = vector.broadcast %cst_10 : f32 to vector<8x256xf32>
    %14 = arith.maximumf %12, %13 : vector<8x256xf32>
    %c0_11 = arith.constant 0 : index
    %c0_12 = arith.constant 0 : index
    %15 = vector.load %arg4[%c0_11, %c0_12] : memref<1x256xf32, #tpu.memory_space<vmem>>, vector<1x256xf32>
    %16 = vector.broadcast %15 : vector<1x256xf32> to vector<8x256xf32>
    %17 = arith.mulf %14, %16 : vector<8x256xf32>
    %cst_13 = arith.constant dense<0.000000e+00> : vector<8xf32>
    %18 = vector.multi_reduction <add>, %17, %cst_13 [1] : vector<8x256xf32> to vector<8xf32>
    %c0_14 = arith.constant 0 : index
    %c0_15 = arith.constant 0 : index
    %19 = memref.load %arg6[%c0_14, %c0_15] : memref<1x1xf32, #tpu.memory_space<smem>>
    %20 = vector.broadcast %19 : f32 to vector<8xf32>
    %21 = arith.addf %18, %20 : vector<8xf32>
    %22 = vector.shape_cast %21 : vector<8xf32> to vector<1x8xf32>
    %c0_16 = arith.constant 0 : index
    %c0_17 = arith.constant 0 : index
    %23 = vector.load %arg7[%c0_16, %c0_17] : memref<1x8xf32, #tpu.memory_space<vmem>>, vector<1x8xf32>
    tpu.vector_store %arg7[%c0_16, %c0_17], %22 {strides = array<i32>} : memref<1x8xf32, #tpu.memory_space<vmem>>, vector<1x8xf32>,
    return
  }
  func.func @transform_0(%arg0: i32) -> (i32, i32) {
    %c0_i32 = arith.constant 0 : i32
    %c0_i32_0 = arith.constant 0 : i32
    return %arg0, %c0_i32 : i32, i32
  }
  func.func @transform_1(%arg0: i32) -> (i32, i32) {
    %c0_i32 = arith.constant 0 : i32
    %c0_i32_0 = arith.constant 0 : i32
    %c0_i32_1 = arith.constant 0 : i32
    return %c0_i32, %c0_i32_0 : i32, i32
  }
  func.func @transform_2(%arg0: i32) -> (i32, i32) {
    %c0_i32 = arith.constant 0 : i32
    %c0_i32_0 = arith.constant 0 : i32
    %c0_i32_1 = arith.constant 0 : i32
    return %c0_i32, %c0_i32_0 : i32, i32
  }
  func.func @transform_3(%arg0: i32) -> (i32, i32) {
    %c0_i32 = arith.constant 0 : i32
    %c0_i32_0 = arith.constant 0 : i32
    %c0_i32_1 = arith.constant 0 : i32
    return %c0_i32, %c0_i32_0 : i32, i32
  }
  func.func @transform_4(%arg0: i32) -> (i32, i32) {
    %c0_i32 = arith.constant 0 : i32
    %c0_i32_0 = arith.constant 0 : i32
    %c0_i32_1 = arith.constant 0 : i32
    return %c0_i32, %c0_i32_0 : i32, i32
  }
  func.func @transform_5(%arg0: i32) -> (i32, i32) {
    %c0_i32 = arith.constant 0 : i32
    %c0_i32_0 = arith.constant 0 : i32
    %c0_i32_1 = arith.constant 0 : i32
    return %c0_i32, %c0_i32_0 : i32, i32
  }
  func.func @transform_6(%arg0: i32) -> (i32, i32) {
    %c0_i32 = arith.constant 0 : i32
    %c0_i32_0 = arith.constant 0 : i32
    return %c0_i32, %arg0 : i32, i32
  }
}

</mosaic_0001>

<llo_original>
// kernel: tpu_custom_call.1
$region0: #{tpu_custom_call.1}
  #allocation0 [shape = 'u32[]', space=smem, size = 0x4, offset = 0x4, fixed_abs, tag = 'smem constant byte address 0x4 - core index']
  #allocation1 [shape = 'u32[144,128]{1,0:T(1,128)}', space=vmem, size = 0x12000, scoped, tag = 'internal scratch']
  #allocation2 [shape = 'f32[1,1]{1,0:T(1,128)S(6)}', space=smem, size = 0x200, scoped, tag = 'scoped memory for tpu_custom_call.1']
  %s0 = inlined_call_operand.hbm [shape: f32[8,16], index: 0, kind: input, shape index: {}]
  %s1 = inlined_call_operand.hbm [shape: f32[16,128], index: 1, kind: input, shape index: {}]
  %s2 = inlined_call_operand.hbm [shape: f32[128,256], index: 2, kind: input, shape index: {}]
  %s3 = inlined_call_operand.vmem [shape: f32[1,256], index: 3, kind: input, shape index: {}]
  %s4 = inlined_call_operand.vmem [shape: f32[1,384], index: 4, kind: input, shape index: {}]
  %s5 = inlined_call_operand.<no memory space> [shape: f32[1,1], index: 5, kind: input, shape index: {}]
  %s6 = inlined_call_operand.hbm [shape: f32[1,8], index: 6, kind: output, shape index: {}]
  %s7 = sld [smem:[#allocation0]]
  $region46: #{tpu_custom_call.1} parent=0
    _
  %s9 = ssub.s32 1, %s7
  %s10 = scalar_select 0, %s9, %s7
  %11 = sst [smem:[#allocation2]] %s5
  $region1: #{tpu_custom_call.1} parent=0
    #allocation3 [shape = 'u8[4096]{0}', space=vmem, size = 0x1000, scoped, tag = 'input window, operand 0, single buffered']
    #allocation4 [shape = 's32[1]{0}', space=sflag, size = 0x4, scoped, tag = 'scoped memory for tpu_custom_call.1']
    #allocation5 [shape = 's32[1]{0}', space=sflag, size = 0x4, scoped, tag = 'scoped memory for tpu_custom_call.1']
    #allocation6 [shape = 'u8[8192]{0}', space=vmem, size = 0x2000, scoped, tag = 'input window, operand 1, single buffered']
    #allocation7 [shape = 's32[1]{0}', space=sflag, size = 0x4, scoped, tag = 'scoped memory for tpu_custom_call.1']
    #allocation8 [shape = 'u8[131072]{0}', space=vmem, size = 0x20000, scoped, tag = 'input window, operand 2, single buffered']
    #allocation9 [shape = 'u8[512]{0}', space=vmem, size = 0x400, scoped, tag = 'output window, operand 0, single buffered']
    %12 = vsyncpa [#allocation4], 0
    %13 = vsyncpa [#allocation7], 0
    %14 = vsyncpa [#allocation5], 0
    // Predicated region
    $region2: #{tpu_custom_call.1} parent=1 // pred_check
      _
    $region3: #{tpu_custom_call.1} parent=1 // pred_check_branch
      %16 = sbr.rel (0) target = $region5
    $region4: #{tpu_custom_call.1} parent=1 // pred_region
      %s18 = ssub.s32 128, 128
      %19 = vsyncadd [#allocation4], %s18
      %s21 = sshll.u32 [#allocation3], 4
      %s22 = int_to_ptr.vmem [resolvable:$true] %s21
      %24 = dma.hbm_to_vmem [thread:$0]  %s0, 128, %s22, [#allocation4]
    $region5: #{tpu_custom_call.1} parent=1 // pred_fallthru
      _
    // Predicated region
    $region6: #{tpu_custom_call.1} parent=1 // pred_check
      _
    $region7: #{tpu_custom_call.1} parent=1 // pred_check_branch
      %26 = sbr.rel (0) target = $region9
    $region8: #{tpu_custom_call.1} parent=1 // pred_region
      %s28 = ssub.s32 256, 256
      %29 = vsyncadd [#allocation7], %s28
      %s30 = sshll.u32 [#allocation6], 4
      %s31 = int_to_ptr.vmem [resolvable:$true] %s30
      %36 = dma.hbm_to_vmem [thread:$0]  %s1, 256, %s31, [#allocation7], 128, 128, 8
    $region9: #{tpu_custom_call.1} parent=1 // pred_fallthru
      _
    // Predicated region
    $region10: #{tpu_custom_call.1} parent=1 // pred_check
      _
    $region11: #{tpu_custom_call.1} parent=1 // pred_check_branch
      %38 = sbr.rel (0) target = $region13
    $region12: #{tpu_custom_call.1} parent=1 // pred_region
      %s40 = ssub.s32 4096, 4096
      %41 = vsyncadd [#allocation7], %s40
      %s42 = sshll.u32 [#allocation8], 4
      %s43 = int_to_ptr.vmem [resolvable:$true] %s42
      %48 = dma.hbm_to_vmem [thread:$0]  %s2, 4096, %s43, [#allocation7], 256, 256, 16
    $region13: #{tpu_custom_call.1} parent=1 // pred_fallthru
      _
    // Predicated region
    $region14: #{tpu_custom_call.1} parent=1 // pred_check
      _
    $region15: #{tpu_custom_call.1} parent=1 // pred_check_branch
      %50 = sbr.rel (0) target = $region17
    $region16: #{tpu_custom_call.1} parent=1 // pred_region
      _
    $region17: #{tpu_custom_call.1} parent=1 // pred_fallthru
      _
    // Predicated region
    $region18: #{tpu_custom_call.1} parent=1 // pred_check
      _
    $region19: #{tpu_custom_call.1} parent=1 // pred_check_branch
      %52 = sbr.rel (0) target = $region21
    $region20: #{tpu_custom_call.1} parent=1 // pred_region
      _
    $region21: #{tpu_custom_call.1} parent=1 // pred_fallthru
      _
    // Predicated region
    $region22: #{tpu_custom_call.1} parent=1 // pred_check
      _
    $region23: #{tpu_custom_call.1} parent=1 // pred_check_branch
      %54 = sbr.rel (0) target = $region25
    $region24: #{tpu_custom_call.1} parent=1 // pred_region
      _
    $region25: #{tpu_custom_call.1} parent=1 // pred_fallthru
      _
    // Predicated region
    $region26: #{tpu_custom_call.1} parent=1 // pred_check
      _
    $region27: #{tpu_custom_call.1} parent=1 // pred_check_branch
      %56 = sbr.rel (0) target = $region29
    $region28: #{tpu_custom_call.1} parent=1 // pred_region
      %57 = dma.done [#allocation4], 128
    $region29: #{tpu_custom_call.1} parent=1 // pred_fallthru
      _
    // Predicated region
    $region30: #{tpu_custom_call.1} parent=1 // pred_check
      _
    $region31: #{tpu_custom_call.1} parent=1 // pred_check_branch
      %59 = sbr.rel (0) target = $region33
    $region32: #{tpu_custom_call.1} parent=1 // pred_region
      %60 = dma.done [#allocation7], 256
    $region33: #{tpu_custom_call.1} parent=1 // pred_fallthru
      _
    // Predicated region
    $region34: #{tpu_custom_call.1} parent=1 // pred_check
      _
    $region35: #{tpu_custom_call.1} parent=1 // pred_check_branch
      %62 = sbr.rel (0) target = $region37
    $region36: #{tpu_custom_call.1} parent=1 // pred_region
      %63 = dma.done [#allocation7], 4096
    $region37: #{tpu_custom_call.1} parent=1 // pred_fallthru
      _
    %v64 = vld [vmem:[#allocation3] sm:$0xff]
    %v65 = vld [vmem:[#allocation6] sm:$0xff]
    %v66 = vld [vmem:[#allocation6 + $0x8] sm:$0xff]
    %v67 = vld [vmem:[%s4] sm:$0x1]
    %v69 = vlaneseq
    %v70 = vshrl.u32 %v69, 7
    %v71 = vsub.s32 0, %v70
    %v72 = vrot.slane %v67, %v71
    %vm74 = vcmask 130048
    %v76 = vsel %vm74, %v64, 0
    %78 = vmatprep.subr.mxu0 0.0
    %79 = vmatpush1.msra.mxu0 %v65
    %80 = vmatprep.subr.mxu0 0.0
    %81 = vmatpush1.msra.mxu0 %v66
    %82 = vmatprep.subr.mxu0 0.0
    %83 = vmatpush1.msra.mxu0 0.0
    %84 = vmatprep.subr.mxu0 0.0
    %85 = vmatpush1.msra.mxu0 0.0
    %86 = vmatprep.subr.mxu0 0.0
    %87 = vmatpush1.msra.mxu0 0.0
    %88 = vmatprep.subr.mxu0 0.0
    %89 = vmatpush1.msra.mxu0 0.0
    %90 = vmatprep.subr.mxu0 0.0
    %91 = vmatpush1.msra.mxu0 0.0
    %92 = vmatprep.subr.mxu0 0.0
    %93 = vmatpush1.msra.mxu0 0.0
    %94 = vmatprep.subr.mxu0 0.0
    %95 = vmatpush1.msra.mxu0 0.0
    %96 = vmatprep.subr.mxu0 0.0
    %97 = vmatpush1.msra.mxu0 0.0
    %98 = vmatprep.subr.mxu0 0.0
    %99 = vmatpush1.msra.mxu0 0.0
    %100 = vmatprep.subr.mxu0 0.0
    %101 = vmatpush1.msra.mxu0 0.0
    %102 = vmatprep.subr.mxu0 0.0
    %103 = vmatpush1.msra.mxu0 0.0
    %104 = vmatprep.subr.mxu0 0.0
    %105 = vmatpush1.msra.mxu0 0.0
    %106 = vmatprep.subr.mxu0 0.0
    %107 = vmatpush1.msra.mxu0 0.0
    %108 = vmatprep.subr.mxu0 0.0
    %109 = vmatpush1.msra.mxu0 0.0
    %110 = vmatprep.subr.mxu0 0.0
    %111 = vmatpush1.msra.mxu0 0.0
    %112 = vmatprep.subr.mxu0 0.0
    %113 = vmatpush1.msra.mxu0 0.0
    %114 = vmatprep.subr.mxu0 0.0
    %115 = vmatpush1.msra.mxu0 0.0
    %116 = vmatprep.subr.mxu0 0.0
    %117 = vmatpush1.msra.mxu0 0.0
    %118 = vmatprep.subr.mxu0 0.0
    %119 = vmatpush1.msra.mxu0 0.0
    %120 = vmatprep.subr.mxu0 0.0
    %121 = vmatpush1.msra.mxu0 0.0
    %122 = vmatprep.subr.mxu0 0.0
    %123 = vmatpush1.msra.mxu0 0.0
    %124 = vmatprep.subr.mxu0 0.0
    %125 = vmatpush1.msra.mxu0 0.0
    %126 = vmatprep.subr.mxu0 0.0
    %127 = vmatpush1.msra.mxu0 0.0
    %128 = vmatprep.subr.mxu0 0.0
    %129 = vmatpush1.msra.mxu0 0.0
    %130 = vmatprep.subr.mxu0 0.0
    %131 = vmatpush1.msra.mxu0 0.0
    %132 = vmatprep.subr.mxu0 0.0
    %133 = vmatpush1.msra.mxu0 0.0
    %134 = vmatprep.subr.mxu0 0.0
    %135 = vmatpush1.msra.mxu0 0.0
    %136 = vmatprep.subr.mxu0 0.0
    %137 = vmatpush1.msra.mxu0 0.0
    %138 = vmatprep.subr.mxu0 0.0
    %139 = vmatpush1.msra.mxu0 0.0
    %140 = vmatprep.subr.mxu0 0.0
    %141 = vmatpush1.msra.mxu0 0.0
    %142 = vmatprep.mubr.f32.mxu0 0.0
    %143 = vmatmul.mubr.f32.gmra.mrb[0].mxu0 %v76
    %v144 = vpop.f32.mrb[0].mxu0
    %v145 = vadd.f32 %v72, %v144
    %v146 = vpop.f32.mrb[0].mxu0
    %147 = vdwg.mxu0
    %v148 = vmax.f32 %v145, 0.0
    %v149 = vld [vmem:[#allocation8] sm:$0xff]
    %v150 = vld [vmem:[#allocation8 + $0x8] sm:$0xff]
    %v151 = vld [vmem:[#allocation8 + $0x10] sm:$0xff]
    %v152 = vld [vmem:[#allocation8 + $0x18] sm:$0xff]
    %v153 = vld [vmem:[#allocation8 + $0x20] sm:$0xff]
    %v154 = vld [vmem:[#allocation8 + $0x28] sm:$0xff]
    %v155 = vld [vmem:[#allocation8 + $0x30] sm:$0xff]
    %v156 = vld [vmem:[#allocation8 + $0x38] sm:$0xff]
    %v157 = vld [vmem:[#allocation8 + $0x40] sm:$0xff]
    %v158 = vld [vmem:[#allocation8 + $0x48] sm:$0xff]
    %v159 = vld [vmem:[#allocation8 + $0x50] sm:$0xff]
    %v160 = vld [vmem:[#allocation8 + $0x58] sm:$0xff]
    %v161 = vld [vmem:[#allocation8 + $0x60] sm:$0xff]
    %v162 = vld [vmem:[#allocation8 + $0x68] sm:$0xff]
    %v163 = vld [vmem:[#allocation8 + $0x70] sm:$0xff]
    %v164 = vld [vmem:[#allocation8 + $0x78] sm:$0xff]
    %v165 = vld [vmem:[#allocation8 + $0x80] sm:$0xff]
    %v166 = vld [vmem:[#allocation8 + $0x88] sm:$0xff]
    %v167 = vld [vmem:[#allocation8 + $0x90] sm:$0xff]
    %v168 = vld [vmem:[#allocation8 + $0x98] sm:$0xff]
    %v169 = vld [vmem:[#allocation8 + $0xa0] sm:$0xff]
    %v170 = vld [vmem:[#allocation8 + $0xa8] sm:$0xff]
    %v171 = vld [vmem:[#allocation8 + $0xb0] sm:$0xff]
    %v172 = vld [vmem:[#allocation8 + $0xb8] sm:$0xff]
    %v173 = vld [vmem:[#allocation8 + $0xc0] sm:$0xff]
    %v174 = vld [vmem:[#allocation8 + $0xc8] sm:$0xff]
    %v175 = vld [vmem:[#allocation8 + $0xd0] sm:$0xff]
    %v176 = vld [vmem:[#allocation8 + $0xd8] sm:$0xff]
    %v177 = vld [vmem:[#allocation8 + $0xe0] sm:$0xff]
    %v178 = vld [vmem:[#allocation8 + $0xe8] sm:$0xff]
    %v179 = vld [vmem:[#allocation8 + $0xf0] sm:$0xff]
    %v180 = vld [vmem:[#allocation8 + $0xf8] sm:$0xff]
    %v181 = vld [vmem:[%s4 + $0x1] sm:$0x3]
    %v183 = vlaneseq
    %v184 = vshrl.u32 %v183, 7
    %v185 = vsub.s32 0, %v184
    %v186 = vrot.slane %v181, %v185
    %v187 = vlaneseq
    %v188 = vshrl.u32 %v187, 7
    %v189 = vsub.s32 1, %v188
    %v190 = vrot.slane %v181, %v189
    %193 = vmatprep.subr.mxu0 %v150
    %194 = vmatpush1.msra.mxu0 %v149
    %195 = vmatprep.subr.mxu0 %v152
    %196 = vmatpush1.msra.mxu0 %v151
    %197 = vmatprep.subr.mxu0 %v154
    %198 = vmatpush1.msra.mxu0 %v153
    %199 = vmatprep.subr.mxu0 %v156
    %200 = vmatpush1.msra.mxu0 %v155
    %201 = vmatprep.subr.mxu0 %v158
    %202 = vmatpush1.msra.mxu0 %v157
    %203 = vmatprep.subr.mxu0 %v160
    %204 = vmatpush1.msra.mxu0 %v159
    %205 = vmatprep.subr.mxu0 %v162
    %206 = vmatpush1.msra.mxu0 %v161
    %207 = vmatprep.subr.mxu0 %v164
    %208 = vmatpush1.msra.mxu0 %v163
    %209 = vmatprep.subr.mxu0 %v166
    %210 = vmatpush1.msra.mxu0 %v165
    %211 = vmatprep.subr.mxu0 %v168
    %212 = vmatpush1.msra.mxu0 %v167
    %213 = vmatprep.subr.mxu0 %v170
    %214 = vmatpush1.msra.mxu0 %v169
    %215 = vmatprep.subr.mxu0 %v172
    %216 = vmatpush1.msra.mxu0 %v171
    %217 = vmatprep.subr.mxu0 %v174
    %218 = vmatpush1.msra.mxu0 %v173
    %219 = vmatprep.subr.mxu0 %v176
    %220 = vmatpush1.msra.mxu0 %v175
    %221 = vmatprep.subr.mxu0 %v178
    %222 = vmatpush1.msra.mxu0 %v177
    %223 = vmatprep.subr.mxu0 %v180
    %224 = vmatpush1.msra.mxu0 %v179
    %225 = vmatprep.subr.mxu0 0.0
    %226 = vmatpush1.msra.mxu0 0.0
    %227 = vmatprep.subr.mxu0 0.0
    %228 = vmatpush1.msra.mxu0 0.0
    %229 = vmatprep.subr.mxu0 0.0
    %230 = vmatpush1.msra.mxu0 0.0
    %231 = vmatprep.subr.mxu0 0.0
    %232 = vmatpush1.msra.mxu0 0.0
    %233 = vmatprep.subr.mxu0 0.0
    %234 = vmatpush1.msra.mxu0 0.0
    %235 = vmatprep.subr.mxu0 0.0
    %236 = vmatpush1.msra.mxu0 0.0
    %237 = vmatprep.subr.mxu0 0.0
    %238 = vmatpush1.msra.mxu0 0.0
    %239 = vmatprep.subr.mxu0 0.0
    %240 = vmatpush1.msra.mxu0 0.0
    %241 = vmatprep.subr.mxu0 0.0
    %242 = vmatpush1.msra.mxu0 0.0
    %243 = vmatprep.subr.mxu0 0.0
    %244 = vmatpush1.msra.mxu0 0.0
    %245 = vmatprep.subr.mxu0 0.0
    %246 = vmatpush1.msra.mxu0 0.0
    %247 = vmatprep.subr.mxu0 0.0
    %248 = vmatpush1.msra.mxu0 0.0
    %249 = vmatprep.subr.mxu0 0.0
    %250 = vmatpush1.msra.mxu0 0.0
    %251 = vmatprep.subr.mxu0 0.0
    %252 = vmatpush1.msra.mxu0 0.0
    %253 = vmatprep.subr.mxu0 0.0
    %254 = vmatpush1.msra.mxu0 0.0
    %255 = vmatprep.subr.mxu0 0.0
    %256 = vmatpush1.msra.mxu0 0.0
    %257 = vmatprep.mubr.f32.mxu0 0.0
    %258 = vmatmul.mubr.f32.gmra.mrb[0].mxu0 %v148
    %v259 = vpop.f32.mrb[0].mxu0
    %v260 = vadd.f32 %v186, %v259
    %v261 = vpop.f32.mrb[0].mxu0
    %v262 = vadd.f32 %v190, %v261
    %263 = vdwg.mxu0
    %v264 = vmax.f32 %v260, 0.0
    %v265 = vmax.f32 %v262, 0.0
    %v266 = vld [vmem:[%s3] sm:$0x3]
    %v268 = vlaneseq
    %v269 = vshrl.u32 %v268, 7
    %v270 = vsub.s32 0, %v269
    %v271 = vrot.slane %v266, %v270
    %v272 = vlaneseq
    %v273 = vshrl.u32 %v272, 7
    %v274 = vsub.s32 1, %v273
    %v275 = vrot.slane %v266, %v274
    %v278 = vmul.f32 %v264, %v271
    %v279 = vmul.f32 %v265, %v275
    %v280 = vadd.f32 %v278, %v279
    %281 = vadd.xlane.f32.xlu0 %v280
    %v282 = vpop.xlane.xlu0 %281
    %s283 = sld [smem:[#allocation2]]
    %v284 = vstv %s283
    %v285 = vadd.f32 %v282, %v284
    %v287 = vlaneseq
    %v288 = vand.u32 %v287, 127
    %v289 = vlaneseq
    %v290 = vshrl.u32 %v289, 7
    %v291 = vsub.s32 %v288, %v290
    %v292 = vrot.slane %v285, %v291
    %vm294 = vcmask 57344
    %295 = vst.msk [vmem:[#allocation9] sm:$0x1] %vm294, %v292
    // Predicated region
    $region38: #{tpu_custom_call.1} parent=1 // pred_check
      _
    $region39: #{tpu_custom_call.1} parent=1 // pred_check_branch
      %297 = sbr.rel (0) target = $region41
    $region40: #{tpu_custom_call.1} parent=1 // pred_region
      %s299 = ssub.s32 16, 16
      %300 = vsyncadd [#allocation5], %s299
      %s302 = sshll.u32 [#allocation9], 4
      %s303 = int_to_ptr.vmem [resolvable:$true] %s302
      %305 = dma.vmem_to_hbm [thread:$0]  %s303, 16, %s6, [#allocation5]
    $region41: #{tpu_custom_call.1} parent=1 // pred_fallthru
      _
    // Predicated region
    $region42: #{tpu_custom_call.1} parent=1 // pred_check
      _
    $region43: #{tpu_custom_call.1} parent=1 // pred_check_branch
      %307 = sbr.rel (0) target = $region45
    $region44: #{tpu_custom_call.1} parent=1 // pred_region
      %308 = dma.done [#allocation5], 16
    $region45: #{tpu_custom_call.1} parent=1 // pred_fallthru
      _
    %309 = vsyncpa [#allocation4], 1
    %310 = vsyncpa [#allocation7], 1
    %311 = vsyncpa [#allocation5], 1

</llo_original>
